<compile_context>
chip_gen: v7x
topology: tpu7x:2x2x1
jax: 0.10.0
libtpu: 0.0.40
codegen_flags: <defaults>
</compile_context>

<pallas_src>
import functools
import math
import numpy as np
import jax
import jax.numpy as jnp
from jax import lax
from jax.experimental import pallas as pl
from jax.experimental.pallas import tpu as pltpu


_TARGET_STEP_BYTES = 4 * 1024 * 1024     # ~4 MiB per grid step -> roofline-efficient
_VMEM_LIMIT = 32 * 1024 * 1024           # safe on v5e/v6e/v7x (<= ~48 MiB headroom on v7x)
_CONF_THR_LOGIT = float(np.log(0.25 / 0.75))   # sigmoid(x) > 0.25  <=>  x > ln(1/3)


def _pick_ba_block(n_ba, rows_per_step, hw):
    """Largest divisor of n_ba whose per-step working set is <= _TARGET_STEP_BYTES."""
    cap = _TARGET_STEP_BYTES // max(1, rows_per_step * hw * 4)
    cap = min(max(1, int(cap)), n_ba)
    for d in range(cap, 0, -1):
        if n_ba % d == 0:
            return d
    return 1


# ----------------------------------------------------------------------------
# Pallas kernels
# ----------------------------------------------------------------------------
def _decode_kernel(p_ref, gxy_ref, anch_ref, pred_ref):
    """YOLO box decode: sigmoid(x,y)+cell offset, exp(w,h)*anchor.

    p_ref    : (BA, 8, HW)  rows 0..3 = x,y,w,h logits (rows 4..7 unused)
    gxy_ref  : (2, HW)      rows = grid_x, grid_y (constant across the grid)
    anch_ref : (BA, 2, 1)   per-(b,a) anchor_w, anchor_h
    pred_ref : (BA, 4, HW)  decoded boxes
    """
    xy = jax.nn.sigmoid(p_ref[:, 0:2, :])
    wh = jnp.exp(p_ref[:, 2:4, :])
    pred_ref[:, 0:2, :] = xy + gxy_ref[...][None, :, :]
    pred_ref[:, 2:4, :] = wh * anch_ref[...]


def _loss_kernel(nC, conf_thr_logit, p_ref, t_ref, out_ref):
    """Per-step partial loss sums (logits-form BCE), written as a (8,128) tile.

    p_ref : (BA, 5+nC, HW) prediction logits [x, y, w, h, conf, cls...]
    t_ref : (BA, 7+nC, HW) targets [tx, ty, tw, th, tconf, obj, conf_mask, tcls...]
    out_ref : (8, 128) f32, row r constant across lanes:
        [loss_xy, loss_wh, loss_conf, loss_cls, n_proposals, 0, 0, 0]
    """
    def bce_logits(x, t):
        # == BCE(sigmoid(x), t) == BCEWithLogits(x, t)
        return jnp.maximum(x, 0.0) - x * t + jnp.log1p(jnp.exp(-jnp.abs(x)))

    obj = t_ref[:, 5:6, :]        # (BA, 1, HW) {0,1}
    cmask = t_ref[:, 6:7, :]      # (BA, 1, HW) {0,1}

    # Reduce over the (small) row axis BEFORE applying the (BA,1,HW) masks:
    # avoids broadcasting the masks up to 2/20 rows and the per-row multiplies.
    loss_xy = jnp.sum(
        jnp.sum(bce_logits(p_ref[:, 0:2, :], t_ref[:, 0:2, :]),
                axis=1, keepdims=True) * obj)

    d = p_ref[:, 2:4, :] - t_ref[:, 2:4, :]
    loss_wh = jnp.sum(jnp.sum(d * d, axis=1, keepdims=True) * obj)

    conf_logit = p_ref[:, 4:5, :]
    loss_conf = jnp.sum(bce_logits(conf_logit, t_ref[:, 4:5, :]) * cmask)

    loss_cls = jnp.sum(
        jnp.sum(bce_logits(p_ref[:, 5:5 + nC, :], t_ref[:, 7:7 + nC, :]),
                axis=1, keepdims=True) * obj)

    # nProposals = sum(sigmoid(conf) > 0.25) over all cells (no padded lanes).
    nprop = jnp.sum((conf_logit > conf_thr_logit).astype(jnp.float32))

    row = lax.broadcasted_iota(jnp.int32, (8, 128), 0)
    out_ref[...] = (jnp.where(row == 0, loss_xy, 0.0)
                    + jnp.where(row == 1, loss_wh, 0.0)
                    + jnp.where(row == 2, loss_conf, 0.0)
                    + jnp.where(row == 3, loss_cls, 0.0)
                    + jnp.where(row == 4, nprop, 0.0))


def yolo_decode(p_raw, gxy, anch):
    """p_raw (nBA, 5+nC, HW), gxy (2, HW), anch (nBA, 2, 1) -> pred (nBA, 4, HW)."""
    nBA, n_rows, HW = p_raw.shape
    row_blk = 8 if n_rows >= 8 else n_rows           # only rows 0..3 are consumed
    ba_blk = _pick_ba_block(nBA, row_blk + 4 + 2, HW)
    n_steps = nBA // ba_blk
    return pl.pallas_call(
        _decode_kernel,
        out_shape=jax.ShapeDtypeStruct((nBA, 4, HW), jnp.float32),
        grid_spec=pltpu.PrefetchScalarGridSpec(
            num_scalar_prefetch=0,
            grid=(n_steps,),
            in_specs=[pl.BlockSpec((ba_blk, row_blk, HW), lambda i: (i, 0, 0)),
                      pl.BlockSpec((2, HW), lambda i: (0, 0)),
                      pl.BlockSpec((ba_blk, 2, 1), lambda i: (i, 0, 0))],
            out_specs=pl.BlockSpec((ba_blk, 4, HW), lambda i: (i, 0, 0)),
        ),
        compiler_params=pltpu.CompilerParams(
            dimension_semantics=("parallel",),
            vmem_limit_bytes=_VMEM_LIMIT),
    )(p_raw, gxy, anch)


def yolo_losses(p_raw, t_slab, nC):
    """Returns (8,) f32: [l_xy, l_wh, l_conf, l_cls, n_proposals, 0, 0, 0]."""
    nBA, _, HW = p_raw.shape
    rows_per_step = (5 + nC) + (7 + nC)
    ba_blk = _pick_ba_block(nBA, rows_per_step, HW)
    n_steps = nBA // ba_blk
    kern = functools.partial(_loss_kernel, nC, _CONF_THR_LOGIT)
    partials = pl.pallas_call(
        kern,
        out_shape=jax.ShapeDtypeStruct((n_steps * 8, 128), jnp.float32),
        grid_spec=pltpu.PrefetchScalarGridSpec(
            num_scalar_prefetch=0,
            grid=(n_steps,),
            in_specs=[pl.BlockSpec((ba_blk, 5 + nC, HW), lambda i: (i, 0, 0)),
                      pl.BlockSpec((ba_blk, 7 + nC, HW), lambda i: (i, 0, 0))],
            out_specs=pl.BlockSpec((8, 128), lambda i: (i, 0)),
        ),
        compiler_params=pltpu.CompilerParams(
            dimension_semantics=("parallel",),      # no cross-step carry -> megacore OK
            vmem_limit_bytes=_VMEM_LIMIT),
    )(p_raw, t_slab)
    # Tiny finish reduction in XLA keeps the Pallas reduction axis parallel.
    return partials.reshape(n_steps, 8, 128)[:, :, 0].sum(axis=0)


# ----------------------------------------------------------------------------
# Host-side (CPU) build_targets — faithful to the original, which also runs it
# on CPU with data-dependent Python loops.
# ----------------------------------------------------------------------------
def _cal_ious(boxes1, boxes2):
    """Standard darknet center-format IOU between corresponding columns (4, N)."""
    b1x, b1y, b1w, b1h = boxes1[0], boxes1[1], boxes1[2], boxes1[3]
    b2x, b2y, b2w, b2h = boxes2[0], boxes2[1], boxes2[2], boxes2[3]
    mx = np.minimum(b1x - b1w / 2.0, b2x - b2w / 2.0)
    Mx = np.maximum(b1x + b1w / 2.0, b2x + b2w / 2.0)
    my = np.minimum(b1y - b1h / 2.0, b2y - b2h / 2.0)
    My = np.maximum(b1y + b1h / 2.0, b2y + b2h / 2.0)
    uw = Mx - mx
    uh = My - my
    cw = b1w + b2w - uw
    ch = b1h + b2h - uh
    carea = np.where((cw <= 0) | (ch <= 0), 0.0, cw * ch)
    area1 = b1w * b1h
    area2 = b2w * b2h
    uarea = area1 + area2 - carea
    return carea / uarea


def _cal_iou(box1, box2):
    return float(_cal_ious(np.asarray(box1, np.float32).reshape(4, 1),
                           np.asarray(box2, np.float32).reshape(4, 1))[0])


def build_targets(pred_boxes, target, anchors, nA, nH, nW, num_classes,
                  net_width, net_height, ignore_thresh):
    # TODO(synk): data-dependent per-ground-truth loops; stays on host (numpy),
    # matching the original module which also runs build_targets on CPU.
    nB = target.shape[0]
    noobj_mask = np.ones((nB, nA, nH, nW), np.float32)
    obj_mask = np.zeros((nB, nA, nH, nW), np.float32)
    tcoord = np.zeros((4, nB, nA, nH, nW), np.float32)
    tconf = np.zeros((nB, nA, nH, nW), np.float32)
    tcls = np.zeros((nB, nA, nH, nW, num_classes), np.float32)
    nAnchors = nA * nH * nW
    nPixels = nH * nW
    nGT = nRecall = nRecall75 = 0
    for b in range(nB):
        cur_pred_boxes = pred_boxes[b * nAnchors:(b + 1) * nAnchors].T  # (4, nAnchors)
        cur_ious = np.zeros(nAnchors, np.float32)
        tbox = target[b].reshape(-1, 5)
        for t in range(50):
            if tbox[t][1] == 0:
                break
            gx, gy = tbox[t][1] * nW, tbox[t][2] * nH
            gw, gh = tbox[t][3] * net_width, tbox[t][4] * net_height
            cur_gt = np.tile(np.array([gx, gy, gw, gh], np.float32)[:, None], (1, nAnchors))
            cur_ious = np.maximum(cur_ious, _cal_ious(cur_pred_boxes, cur_gt))
        ignore_ix = (cur_ious > ignore_thresh).reshape(nA, nH, nW)
        noobj_mask[b][ignore_ix] = 0
        for t in range(50):
            if tbox[t][1] == 0:
                break
            nGT += 1
            gx, gy = tbox[t][1] * nW, tbox[t][2] * nH
            gw, gh = float(tbox[t][3] * net_width), float(tbox[t][4] * net_height)
            gi, gj = int(gx), int(gy)
            tmp_gt = np.tile(np.array([0.0, 0.0, gw, gh], np.float32)[:, None], (1, nA))
            # original: torch.cat((torch.zeros(nA, len(anchors)), anchors), 1).t()
            anchor_boxes = np.concatenate(
                [np.zeros((nA, len(anchors)), np.float32), anchors], axis=1).T
            best_n = int(np.argmax(_cal_ious(anchor_boxes, tmp_gt)))
            gt_box = np.array([gx, gy, gw, gh], np.float32)
            pred_box = pred_boxes[b * nAnchors + best_n * nPixels + gj * nW + gi]
            iou = _cal_iou(gt_box, pred_box)
            obj_mask[b, best_n, gj, gi] = 1
            noobj_mask[b, best_n, gj, gi] = 0
            tcoord[0, b, best_n, gj, gi] = gx - gi
            tcoord[1, b, best_n, gj, gi] = gy - gj
            tcoord[2, b, best_n, gj, gi] = math.log(gw / anchors[best_n][0])
            tcoord[3, b, best_n, gj, gi] = math.log(gh / anchors[best_n][1])
            tcls[b, best_n, gj, gi, int(tbox[t][0])] = 1
            tconf[b, best_n, gj, gi] = iou
            if iou > 0.5:
                nRecall += 1
                if iou > 0.75:
                    nRecall75 += 1
    return nGT, nRecall, nRecall75, obj_mask, noobj_mask, tcoord, tconf, tcls


# ----------------------------------------------------------------------------
# YoloLayer.forward
# ----------------------------------------------------------------------------
def yolo_layer_forward(output, target, anchors, num_classes=20,
                       net_width=416, net_height=416, ignore_thresh=0.5,
                       seen=0, nth_layer=0):
    # TODO(synk): original __init__ assigns net_width twice and never net_height;
    # we use net_height=416 (the intended value) so build_targets is well defined.
    output = jnp.asarray(output, jnp.float32)
    nB = output.shape[0]
    nA = len(anchors)
    nC = num_classes
    nW = output.shape[2]   # original's naming: nW = size(2), nH = size(3)
    nH = output.shape[3]
    # TODO(synk): like the original, the view below treats the flattened trailing
    # axes as (nH, nW) even though they are (size(2), size(3)); only self-consistent
    # for square feature maps (true here and in typical darknet YOLO heads).
    anchors_np = np.asarray(anchors, np.float32).reshape(nA, -1)
    nBA = nB * nA
    HW = nH * nW

    # --- zero-copy view of the raw NCHW output: (nBA, 5+nC, HW).  No XLA transpose
    # and no lane padding: both kernels BlockSpec-index this layout directly.
    p_raw = output.reshape(nBA, 5 + nC, HW)

    # --- tiny decode side-inputs: constant (2, HW) grid rows + (nBA, 2, 1) anchors.
    hw_idx = np.arange(HW)
    gxy = np.stack([(hw_idx % nW).astype(np.float32),
                    (hw_idx // nW).astype(np.float32)], axis=0)          # (2, HW)
    anch = np.zeros((nBA, 2, 1), np.float32)
    anch[:, 0, 0] = np.tile(anchors_np[:, 0], nB)
    anch[:, 1, 0] = np.tile(anchors_np[:, 1], nB)

    pred = yolo_decode(p_raw, jnp.asarray(gxy), jnp.asarray(anch))       # (nBA, 4, HW)

    # pred_boxes to host (original also converts to CPU) as (nBA*HW, 4)
    pred_boxes = np.asarray(pred).transpose(0, 2, 1).reshape(-1, 4)
    nGT, nRecall, nRecall75, obj_mask, noobj_mask, tcoord, tconf, tcls = build_targets(
        pred_boxes, np.asarray(target, np.float32), anchors_np, nA, nH, nW,
        nC, net_width, net_height, ignore_thresh)

    # --- pack all targets / masks into one (nBA, 7+nC, HW) slab (host, numpy) ----
    t_slab = np.zeros((nBA, 7 + nC, HW), np.float32)
    t_slab[:, 0:4, :] = tcoord.transpose(1, 2, 0, 3, 4).reshape(nBA, 4, HW)
    t_slab[:, 4, :] = tconf.reshape(nBA, HW)
    t_slab[:, 5, :] = (obj_mask == 1).astype(np.float32).reshape(nBA, HW)
    t_slab[:, 6, :] = (obj_mask + noobj_mask).reshape(nBA, HW)
    t_slab[:, 7:7 + nC, :] = tcls.reshape(nBA, HW, nC).transpose(0, 2, 1)

    # single device->host fetch of the 8 sums (needed for the metrics print anyway)
    sums = np.asarray(yolo_losses(p_raw, jnp.asarray(t_slab), nC))

    loss_coord = float(sums[0] + sums[1]) / nB
    loss_conf = float(sums[2]) / nB
    loss_cls = float(sums[3]) / nB
    nProposals = int(round(float(sums[4])))
    if math.isnan(loss_conf):
        loss = loss_coord + loss_cls
    else:
        loss = loss_coord + loss_conf + loss_cls
    print('%d: Layer(%03d) nGT %3d, nRC %3d, nRC75 %3d, nPP %3d, '
          'loss: box %6.3f, conf %6.3f, class %6.3f, total %7.3f' %
          (seen, nth_layer, nGT, nRecall, nRecall75, nProposals,
           loss_coord, loss_conf, loss_cls, loss))
    return jnp.asarray(loss, jnp.float32)


# ----------------------------------------------------------------------------
# Main
# ----------------------------------------------------------------------------
if __name__ == "__main__":
    nB, nC = 2, 20
    nH = nW = 8
    anchors = [[1.3221, 1.73145], [3.19275, 4.00944]]   # nA = 2 anchor pairs
    nA = len(anchors)

    key = jax.random.PRNGKey(0)
    k1, k2, k3, k4 = jax.random.split(key, 4)

    # raw network output, NCHW: (nB, nA*(5+nC), H, W)
    output = 0.5 * jax.random.normal(k1, (nB, nA * (5 + nC), nW, nH), jnp.float32)

    # target: (nB, 250) = 50 boxes x [class, x, y, w, h]; 2 real boxes per image
    n_boxes = 2
    cls_ids = np.asarray(jax.random.randint(k2, (nB, n_boxes), 0, nC))
    xy = np.asarray(jax.random.uniform(k3, (nB, n_boxes, 2), minval=0.1, maxval=0.9))
    wh = np.asarray(jax.random.uniform(k4, (nB, n_boxes, 2), minval=0.03, maxval=0.15))
    target = np.zeros((nB, 250), np.float32)
    for b in range(nB):
        for t in range(n_boxes):
            target[b, t * 5 + 0] = float(cls_ids[b, t])
            target[b, t * 5 + 1] = xy[b, t, 0]
            target[b, t * 5 + 2] = xy[b, t, 1]
            target[b, t * 5 + 3] = wh[b, t, 0]
            target[b, t * 5 + 4] = wh[b, t, 1]

    loss = yolo_layer_forward(output, target, anchors, num_classes=nC)
    jax.block_until_ready(loss)
    assert np.isfinite(float(loss))
    print("KERNEL_OK")
</pallas_src>

<mosaic_0001>
module attributes {stable_mosaic.version = 11 : i64} {
  func.func @_decode_kernel(%arg0: i32, %arg1: memref<4x8x64xf32, #tpu.memory_space<vmem>>, %arg2: memref<2x64xf32, #tpu.memory_space<vmem>>, %arg3: memref<4x2x1xf32, #tpu.memory_space<vmem>>, %arg4: memref<4x4x64xf32, #tpu.memory_space<vmem>>) attributes {dimension_semantics = [#tpu.dimension_semantics<parallel>], iteration_bounds = array<i64: 1>, scalar_prefetch = 0 : i64, scratch_operands = 0 : i64, tpu.core_type = #tpu.core_type<tc>, window_params = [{transform_indices = @transform_0, window_bounds = array<i64: 4, 8, 64>}, {pipeline_mode = #tpu.pipeline_mode<synchronous>, transform_indices = @transform_1, window_bounds = array<i64: 2, 64>}, {transform_indices = @transform_2, window_bounds = array<i64: 4, 2, 1>}, {transform_indices = @transform_3, window_bounds = array<i64: 4, 4, 64>}]} {
    %c0 = arith.constant 0 : index
    %c0_0 = arith.constant 0 : index
    %c0_1 = arith.constant 0 : index
    %0 = vector.load %arg1[%c0, %c0_0, %c0_1] : memref<4x8x64xf32, #tpu.memory_space<vmem>>, vector<4x2x64xf32>
    %1 = arith.negf %0 : vector<4x2x64xf32>
    %2 = math.exp %1 : vector<4x2x64xf32>
    %cst = arith.constant 1.000000e+00 : f32
    %3 = vector.broadcast %cst : f32 to vector<4x2x64xf32>
    %4 = arith.addf %3, %2 : vector<4x2x64xf32>
    %5 = arith.divf %3, %4 : vector<4x2x64xf32>
    %c0_2 = arith.constant 0 : index
    %c2 = arith.constant 2 : index
    %c0_3 = arith.constant 0 : index
    %6 = vector.load %arg1[%c0_2, %c2, %c0_3] : memref<4x8x64xf32, #tpu.memory_space<vmem>>, vector<4x2x64xf32>
    %7 = math.exp %6 : vector<4x2x64xf32>
    %c0_4 = arith.constant 0 : index
    %c0_5 = arith.constant 0 : index
    %8 = vector.load %arg2[%c0_4, %c0_5] : memref<2x64xf32, #tpu.memory_space<vmem>>, vector<2x64xf32>
    %9 = vector.shape_cast %8 : vector<2x64xf32> to vector<1x2x64xf32>
    %10 = vector.broadcast %9 : vector<1x2x64xf32> to vector<4x2x64xf32>
    %11 = arith.addf %5, %10 : vector<4x2x64xf32>
    %c0_6 = arith.constant 0 : index
    %c0_7 = arith.constant 0 : index
    %c0_8 = arith.constant 0 : index
    %12 = vector.load %arg4[%c0_6, %c0_7, %c0_8] : memref<4x4x64xf32, #tpu.memory_space<vmem>>, vector<4x2x64xf32>
    tpu.vector_store %arg4[%c0_6, %c0_7, %c0_8], %11 {strides = array<i32>} : memref<4x4x64xf32, #tpu.memory_space<vmem>>, vector<4x2x64xf32>,
    %c0_9 = arith.constant 0 : index
    %c0_10 = arith.constant 0 : index
    %c0_11 = arith.constant 0 : index
    %13 = vector.load %arg3[%c0_9, %c0_10, %c0_11] : memref<4x2x1xf32, #tpu.memory_space<vmem>>, vector<4x2x1xf32>
    %14 = vector.broadcast %13 : vector<4x2x1xf32> to vector<4x2x64xf32>
    %15 = arith.mulf %7, %14 : vector<4x2x64xf32>
    %c0_12 = arith.constant 0 : index
    %c2_13 = arith.constant 2 : index
    %c0_14 = arith.constant 0 : index
    %16 = vector.load %arg4[%c0_12, %c2_13, %c0_14] : memref<4x4x64xf32, #tpu.memory_space<vmem>>, vector<4x2x64xf32>
    tpu.vector_store %arg4[%c0_12, %c2_13, %c0_14], %15 {strides = array<i32>} : memref<4x4x64xf32, #tpu.memory_space<vmem>>, vector<4x2x64xf32>,
    return
  }
  func.func @transform_0(%arg0: i32) -> (i32, i32, i32) {
    %c0_i32 = arith.constant 0 : i32
    %c0_i32_0 = arith.constant 0 : i32
    %c0_i32_1 = arith.constant 0 : i32
    return %arg0, %c0_i32, %c0_i32_0 : i32, i32, i32
  }
  func.func @transform_1(%arg0: i32) -> (i32, i32) {
    %c0_i32 = arith.constant 0 : i32
    %c0_i32_0 = arith.constant 0 : i32
    %c0_i32_1 = arith.constant 0 : i32
    return %c0_i32, %c0_i32_0 : i32, i32
  }
  func.func @transform_2(%arg0: i32) -> (i32, i32, i32) {
    %c0_i32 = arith.constant 0 : i32
    %c0_i32_0 = arith.constant 0 : i32
    %c0_i32_1 = arith.constant 0 : i32
    return %arg0, %c0_i32, %c0_i32_0 : i32, i32, i32
  }
  func.func @transform_3(%arg0: i32) -> (i32, i32, i32) {
    %c0_i32 = arith.constant 0 : i32
    %c0_i32_0 = arith.constant 0 : i32
    %c0_i32_1 = arith.constant 0 : i32
    return %arg0, %c0_i32, %c0_i32_0 : i32, i32, i32
  }
}

</mosaic_0001>

<llo_original>
// kernel: tpu_custom_call.1
$region0: #{tpu_custom_call.1}
  #allocation0 [shape = 'u32[]', space=smem, size = 0x4, offset = 0x4, fixed_abs, tag = 'smem constant byte address 0x4 - core index']
  #allocation1 [shape = 'u32[144,128]{1,0:T(1,128)}', space=vmem, size = 0x12000, scoped, tag = 'internal scratch']
  %s0 = inlined_call_operand.vmem [shape: f32[4,25,64], index: 0, kind: input, shape index: {}]
  %s1 = inlined_call_operand.vmem [shape: f32[2,64], index: 1, kind: input, shape index: {}]
  %s2 = inlined_call_operand.vmem [shape: f32[4,2,1], index: 2, kind: input, shape index: {}]
  %s3 = inlined_call_operand.hbm [shape: f32[4,4,64], index: 3, kind: output, shape index: {}]
  %s4 = sld [smem:[#allocation0]]
  $region60: #{tpu_custom_call.1} parent=0
    _
  %s6 = ssub.s32 1, %s4
  %s7 = scalar_select 0, %s6, %s4
  $region1: #{tpu_custom_call.1} parent=0
    #allocation2 [shape = 'u8[16384]{0}', space=vmem, size = 0x4000, scoped, tag = 'input window, operand 0, single buffered']
    #allocation3 [shape = 'u8[8192]{0}', space=vmem, size = 0x2000, scoped, tag = 'output window, operand 0, single buffered']
    #allocation4 [shape = 's32[1]{0}', space=sflag, size = 0x4, scoped, tag = 'scoped memory for tpu_custom_call.1']
    %8 = vsyncpa [#allocation4], 0
    // Predicated region
    $region2: #{tpu_custom_call.1} parent=1 // pred_check
      _
    $region3: #{tpu_custom_call.1} parent=1 // pred_check_branch
      %10 = sbr.rel (0) target = $region5
    $region4: #{tpu_custom_call.1} parent=1 // pred_region
      // Predicated region
      $region6: #{tpu_custom_call.1} parent=4 // pred_check
        _
      $region7: #{tpu_custom_call.1} parent=4 // pred_check_branch
        %12 = sbr.rel (0) target = $region9
      $region8: #{tpu_custom_call.1} parent=4 // pred_region
        // Predicated region
        $region10: #{tpu_custom_call.1} parent=8 // pred_check
          _
        $region11: #{tpu_custom_call.1} parent=8 // pred_check_branch
          %14 = sbr.rel (0) target = $region13
        $region12: #{tpu_custom_call.1} parent=8 // pred_region
          // Predicated region
          $region25: #{tpu_custom_call.1} parent=12 // pred_check
            _
          $region26: #{tpu_custom_call.1} parent=12 // pred_check_branch
            %35 = sbr.rel (0) target = $region28
          $region27: #{tpu_custom_call.1} parent=12 // pred_region
            loop: start=0, step=1, limit=1
            $region29: #{tpu_custom_call.1} parent=27 // loop_pre_header
              _
            $region30: #{tpu_custom_call.1} parent=27 // loop_header
              %s37 = sphi 0, %s41
              %p38 = scmp.ge.s32.totalorder %s37, 1
              %s42 = sphi %s0, %s0
              %s43 = sphi [#allocation2], [#allocation2]
            $region31: #{tpu_custom_call.1} parent=27 // loop_header_branch
              %40 = sbr.rel (%p38) target = $region35
            $region32: #{tpu_custom_call.1} parent=27 // loop_body
              %v44 = vld [vmem:[%s42] sm:$0xff]
              %45 = vst [vmem:[%s43] sm:$0xff] %v44
              %v46 = vld [vmem:[%s42 + $0x20] sm:$0xff]
              %47 = vst [vmem:[%s43 + $0x8] sm:$0xff] %v46
              %v48 = vld [vmem:[%s42 + $0x40] sm:$0xff]
              %49 = vst [vmem:[%s43 + $0x10] sm:$0xff] %v48
              %v50 = vld [vmem:[%s42 + $0x60] sm:$0xff]
              %51 = vst [vmem:[%s43 + $0x18] sm:$0xff] %v50
            $region33: #{tpu_custom_call.1} parent=27 // loop_footer
              %s41 = sadd.s32 1, %s37
            $region34: #{tpu_custom_call.1} parent=27 // loop_footer_branch
              %36 = sbr.rel target = $region30
            $region35: #{tpu_custom_call.1} parent=27 // loop_exit
              _
          $region28: #{tpu_custom_call.1} parent=12 // pred_fallthru
            _
          // Predicated region
          $region36: #{tpu_custom_call.1} parent=12 // pred_check
            _
          $region37: #{tpu_custom_call.1} parent=12 // pred_check_branch
            %53 = sbr.rel target = $region39
          $region38: #{tpu_custom_call.1} parent=12 // pred_region
            _
          $region39: #{tpu_custom_call.1} parent=12 // pred_fallthru
            _
        $region13: #{tpu_custom_call.1} parent=8 // pred_fallthru
          _
        // Predicated region
        $region14: #{tpu_custom_call.1} parent=8 // pred_check
          _
        $region15: #{tpu_custom_call.1} parent=8 // pred_check_branch
          %16 = sbr.rel target = $region17
        $region16: #{tpu_custom_call.1} parent=8 // pred_region
          loop: start=0, step=1, limit=1
          $region18: #{tpu_custom_call.1} parent=16 // loop_pre_header
            _
          $region19: #{tpu_custom_call.1} parent=16 // loop_header
            %s19 = sphi 0, %s23
            %p20 = scmp.ge.s32.totalorder %s19, 1
            %s24 = sphi %s0, %s0
            %s25 = sphi [#allocation2], [#allocation2]
          $region20: #{tpu_custom_call.1} parent=16 // loop_header_branch
            %22 = sbr.rel (%p20) target = $region24
          $region21: #{tpu_custom_call.1} parent=16 // loop_body
            %v26 = vld [vmem:[%s24] sm:$0xff]
            %27 = vst [vmem:[%s25] sm:$0xff] %v26
            %v28 = vld [vmem:[%s24 + $0x20] sm:$0xff]
            %29 = vst [vmem:[%s25 + $0x8] sm:$0xff] %v28
            %v30 = vld [vmem:[%s24 + $0x40] sm:$0xff]
            %31 = vst [vmem:[%s25 + $0x10] sm:$0xff] %v30
            %v32 = vld [vmem:[%s24 + $0x60] sm:$0xff]
            %33 = vst [vmem:[%s25 + $0x18] sm:$0xff] %v32
          $region22: #{tpu_custom_call.1} parent=16 // loop_footer
            %s23 = sadd.s32 1, %s19
          $region23: #{tpu_custom_call.1} parent=16 // loop_footer_branch
            %18 = sbr.rel target = $region19
          $region24: #{tpu_custom_call.1} parent=16 // loop_exit
            _
        $region17: #{tpu_custom_call.1} parent=8 // pred_fallthru
          _
      $region9: #{tpu_custom_call.1} parent=4 // pred_fallthru
        _
      %54 = vnop
    $region5: #{tpu_custom_call.1} parent=1 // pred_fallthru
      _
    // Predicated region
    $region40: #{tpu_custom_call.1} parent=1 // pred_check
      _
    $region41: #{tpu_custom_call.1} parent=1 // pred_check_branch
      %56 = sbr.rel (0) target = $region43
    $region42: #{tpu_custom_call.1} parent=1 // pred_region
      _
    $region43: #{tpu_custom_call.1} parent=1 // pred_fallthru
      _
    // Predicated region
    $region44: #{tpu_custom_call.1} parent=1 // pred_check
      _
    $region45: #{tpu_custom_call.1} parent=1 // pred_check_branch
      %58 = sbr.rel (0) target = $region47
    $region46: #{tpu_custom_call.1} parent=1 // pred_region
      _
    $region47: #{tpu_custom_call.1} parent=1 // pred_fallthru
      _
    // Predicated region
    $region48: #{tpu_custom_call.1} parent=1 // pred_check
      _
    $region49: #{tpu_custom_call.1} parent=1 // pred_check_branch
      %60 = sbr.rel (0) target = $region51
    $region50: #{tpu_custom_call.1} parent=1 // pred_region
      _
    $region51: #{tpu_custom_call.1} parent=1 // pred_fallthru
      _
    %v61 = vld [vmem:[#allocation2] sm:$0x3]
    %v62 = vld [vmem:[#allocation2 + $0x8] sm:$0x3]
    %v63 = vld [vmem:[#allocation2 + $0x10] sm:$0x3]
    %v64 = vld [vmem:[#allocation2 + $0x18] sm:$0x3]
    %v65 = vxor.u32 %v61, 2147483648
    %v66 = vxor.u32 %v62, 2147483648
    %v67 = vxor.u32 %v63, 2147483648
    %v68 = vxor.u32 %v64, 2147483648
    %v69 = vmul.f32 %v65, 1.442695
    %v70 = vpow.pop %v69
    %v71 = vmul.f32 %v66, 1.442695
    %v72 = vpow.pop %v71
    %v73 = vmul.f32 %v67, 1.442695
    %v74 = vpow.pop %v73
    %v75 = vmul.f32 %v68, 1.442695
    %v76 = vpow.pop %v75
    %v77 = vadd.f32 %v70, 1.0
    %v78 = vadd.f32 %v72, 1.0
    %v79 = vadd.f32 %v74, 1.0
    %v80 = vadd.f32 %v76, 1.0
    %v81 = vrcp.pop %v77
    %v82 = vmul.f32 1.0, %v81
    %v83 = vrcp.pop %v78
    %v84 = vmul.f32 1.0, %v83
    %v85 = vrcp.pop %v79
    %v86 = vmul.f32 1.0, %v85
    %v87 = vrcp.pop %v80
    %v88 = vmul.f32 1.0, %v87
    %v89 = vld [vmem:[#allocation2 + $0x2] sm:$0x3]
    %v90 = vld [vmem:[#allocation2 + $0xa] sm:$0x3]
    %v91 = vld [vmem:[#allocation2 + $0x12] sm:$0x3]
    %v92 = vld [vmem:[#allocation2 + $0x1a] sm:$0x3]
    %v93 = vmul.f32 %v89, 1.442695
    %v94 = vpow.pop %v93
    %v95 = vmul.f32 %v90, 1.442695
    %v96 = vpow.pop %v95
    %v97 = vmul.f32 %v91, 1.442695
    %v98 = vpow.pop %v97
    %v99 = vmul.f32 %v92, 1.442695
    %v100 = vpow.pop %v99
    %v101 = vld [vmem:[%s1] sm:$0x3]
    %v102 = vadd.f32 %v82, %v101
    %v103 = vadd.f32 %v84, %v101
    %v104 = vadd.f32 %v86, %v101
    %v105 = vadd.f32 %v88, %v101
    %vm106 = vcmask 517120
    %107 = vst.msk [vmem:[#allocation3] sm:$0x3] %vm106, %v102
    %108 = vst.msk [vmem:[#allocation3 + $0x4] sm:$0x3] %vm106, %v103
    %109 = vst.msk [vmem:[#allocation3 + $0x8] sm:$0x3] %vm106, %v104
    %110 = vst.msk [vmem:[#allocation3 + $0xc] sm:$0x3] %vm106, %v105
    %v111 = vld [vmem:[%s2] sm:$0x3]
    %v112 = vld [vmem:[%s2 + $0x2] sm:$0x3]
    %v113 = vld [vmem:[%s2 + $0x4] sm:$0x3]
    %v114 = vld [vmem:[%s2 + $0x6] sm:$0x3]
    %116 = vset.pattern.permute.xlu0 0
    %117 = vperm.xlu0 %116, %v111
    %v118 = vpop.permute.xlu0 %117
    %121 = vset.pattern.permute.xlu0 0
    %122 = vperm.xlu0 %121, %v112
    %v123 = vpop.permute.xlu0 %122
    %126 = vset.pattern.permute.xlu0 0
    %127 = vperm.xlu0 %126, %v113
    %v128 = vpop.permute.xlu0 %127
    %131 = vset.pattern.permute.xlu0 0
    %132 = vperm.xlu0 %131, %v114
    %v133 = vpop.permute.xlu0 %132
    %v135 = vmul.f32 %v94, %v118
    %v136 = vmul.f32 %v96, %v123
    %v137 = vmul.f32 %v98, %v128
    %v138 = vmul.f32 %v100, %v133
    %139 = vst.msk [vmem:[#allocation3 + $0x2] sm:$0x3] %vm106, %v135
    %140 = vst.msk [vmem:[#allocation3 + $0x6] sm:$0x3] %vm106, %v136
    %141 = vst.msk [vmem:[#allocation3 + $0xa] sm:$0x3] %vm106, %v137
    %142 = vst.msk [vmem:[#allocation3 + $0xe] sm:$0x3] %vm106, %v138
    // Predicated region
    $region52: #{tpu_custom_call.1} parent=1 // pred_check
      _
    $region53: #{tpu_custom_call.1} parent=1 // pred_check_branch
      %144 = sbr.rel (0) target = $region55
    $region54: #{tpu_custom_call.1} parent=1 // pred_region
      %s146 = ssub.s32 256, 256
      %147 = vsyncadd [#allocation4], %s146
      %s148 = sshll.u32 [#allocation3], 4
      %s149 = int_to_ptr.vmem [resolvable:$true] %s148
      %154 = dma.vmem_to_hbm [thread:$0]  %s149, 256, %s3, [#allocation4], 64, 64, 4
    $region55: #{tpu_custom_call.1} parent=1 // pred_fallthru
      _
    // Predicated region
    $region56: #{tpu_custom_call.1} parent=1 // pred_check
      _
    $region57: #{tpu_custom_call.1} parent=1 // pred_check_branch
      %156 = sbr.rel (0) target = $region59
    $region58: #{tpu_custom_call.1} parent=1 // pred_region
      %157 = dma.done [#allocation4], 256
    $region59: #{tpu_custom_call.1} parent=1 // pred_fallthru
      _
    %158 = vsyncpa [#allocation4], 1

</llo_original>
